<compile_context>
chip_gen: v5e
topology: v5e:2x2
jax: 0.10.0
libtpu: 0.0.40
codegen_flags: <defaults>
</compile_context>

<pallas_src>
import jax
import jax.numpy as jnp
from jax.experimental import pallas as pl
from jax.experimental.pallas import tpu as pltpu


def _pair_embed_kernel(x1_ref, x2_ref, w_ref, b_ref, o1_ref, o2_ref,
                       p1_ref, p2_ref):
    # x*_ref: (TN, S, H) bf16/f32     w_ref: (H, TD) bf16     b_ref: (1, TD) f32
    # o*_ref: (TN, TD) f32            p*_ref: (TN, H) bf16 scratch (pooled rows)
    d = pl.program_id(1)

    @pl.when(d == 0)
    def _pool():
        # Upcast BEFORE the mean (v5e VPU has no bf16 ALU); pool over S once per
        # row tile and reuse the pooled activations for every D tile.
        p1_ref[...] = jnp.mean(x1_ref[...].astype(jnp.float32),
                               axis=1).astype(p1_ref.dtype)
        p2_ref[...] = jnp.mean(x2_ref[...].astype(jnp.float32),
                               axis=1).astype(p2_ref.dtype)

    w = w_ref[...]
    bias = b_ref[...]
    # bf16 x bf16 on the MXU with f32 accumulation.
    o1_ref[...] = (jnp.dot(p1_ref[...], w, preferred_element_type=jnp.float32)
                   + bias).astype(o1_ref.dtype)
    o2_ref[...] = (jnp.dot(p2_ref[...], w, preferred_element_type=jnp.float32)
                   + bias).astype(o2_ref.dtype)


def _round_up(v, m):
    return ((v + m - 1) // m) * m


def _vmem_capacity_bytes():
    try:
        cap = getattr(pltpu.get_tpu_info(), "vmem_capacity_bytes", None)
        if cap:
            return int(cap)
    except Exception:
        pass
    return 64 * 1024 * 1024  # conservative fallback: v7x physical VMEM per TC


def _block_spec(shape, index_map, single_buffer):
    # Resident (never re-fetched) params keep a single VMEM buffer instead of
    # the default double buffer (halves their VMEM footprint).
    if single_buffer and hasattr(pl, "Buffered"):
        try:
            return pl.BlockSpec(shape, index_map, pipeline_mode=pl.Buffered(1))
        except TypeError:  # older jax without pipeline_mode= — fall back
            pass
    return pl.BlockSpec(shape, index_map)


def embed_pair(x1, x2, w, b, *, tn=None, td=None):
    """Embed two description batches in ONE pallas_call.

    x1, x2: (N, S, H)    w: (H, D)    b: (1, D)   ->   ((N, D) f32, (N, D) f32)
    """
    assert x1.shape == x2.shape, "pair model expects equally sized description batches"
    N, S, H = x1.shape
    D = w.shape[1]

    w = w.astype(jnp.bfloat16)   # no-op if the model already stores bf16
    b = b.astype(jnp.float32)

    # --- D tiling: lane-dense blocks, 512 wide (fills the 256-wide MXU) ------
    lane = 128
    if td is None:
        td = min(512, _round_up(D, lane))
    td = _round_up(td, lane)
    Dp = _round_up(D, td)                 # pad D so the d-grid divides exactly
    d_tiles = Dp // td
    if Dp != D:                           # parameter-sized pad only (pre-pad at prod)
        w = jnp.pad(w, ((0, 0), (0, Dp - D)))
        b = jnp.pad(b, ((0, 0), (0, Dp - D)))
    resident_w = (d_tiles == 1)

    # --- VMEM-budget-aware row tile (tn) --------------------------------------
    x_bytes = x1.dtype.itemsize
    w_bufs = 1 if resident_w else 2
    per_row_bytes = (2 * 2 * S * H * x_bytes   # two x tiles, double-buffered
                     + 2 * 2 * td * 4          # two f32 output tiles, double-buffered
                     + 2 * H * 2)              # two pooled bf16 scratches
    fixed_bytes = w_bufs * H * td * 2 + w_bufs * td * 4
    usable = (_vmem_capacity_bytes() * 5) // 8  # ~40 MiB of 64 (v7x), ~80 of 128
    if tn is None:
        tn = max(8, min(256, ((usable - fixed_bytes) // max(per_row_bytes, 1)) // 8 * 8))
        tn = min(tn, _round_up(N, 8))
        # v7x: make sure the "parallel" axis has >= 2 steps for moderate N so
        # the second TensorCore gets work (no effect on single-TC v5e/v6e).
        if N > 8 and pl.cdiv(N, tn) < 2:
            tn = max(8, _round_up(pl.cdiv(N, 2), 8))
    n_tiles = pl.cdiv(N, tn)

    vmem_need = tn * per_row_bytes + fixed_bytes
    vmem_limit = int(min(max(2 * vmem_need, 16 << 20), 96 << 20))

    in_specs = [
        pl.BlockSpec((tn, S, H), lambda n, d: (n, 0, 0)),   # desc 1 rows
        pl.BlockSpec((tn, S, H), lambda n, d: (n, 0, 0)),   # desc 2 rows
        _block_spec((H, td), lambda n, d: (0, d), resident_w),   # W (D-tiled)
        _block_spec((1, td), lambda n, d: (0, d), resident_w),   # bias
    ]
    out_specs = [
        pl.BlockSpec((tn, td), lambda n, d: (n, d)),         # lane-dense outputs
        pl.BlockSpec((tn, td), lambda n, d: (n, d)),
    ]

    out1, out2 = pl.pallas_call(
        _pair_embed_kernel,
        out_shape=(jax.ShapeDtypeStruct((N, Dp), jnp.float32),
                   jax.ShapeDtypeStruct((N, Dp), jnp.float32)),
        grid_spec=pltpu.PrefetchScalarGridSpec(
            num_scalar_prefetch=0,
            grid=(n_tiles, d_tiles),
            in_specs=in_specs,
            out_specs=out_specs,
            scratch_shapes=[pltpu.VMEM((tn, H), jnp.bfloat16),
                            pltpu.VMEM((tn, H), jnp.bfloat16)],
        ),
        compiler_params=pltpu.CompilerParams(
            # n axis is independent rows; d axis carries the pooled scratch
            # (init at d==0) so it must stay "arbitrary".
            dimension_semantics=("parallel", "arbitrary"),
            vmem_limit_bytes=vmem_limit,
        ),
    )(x1, x2, w, b)

    # Strip the lane padding of the embedding dimension.
    return out1[:, :D], out2[:, :D]


class PairEmbeddingModel:
    """JAX/Pallas port of PairEmbeddingModel's forward pass."""

    def __init__(self, model_name: str, hidden: int, emb_dim: int, key):
        self.model_name = model_name
        kw, kb = jax.random.split(key)
        # Synthetic encoder parameters standing in for `run_to_model_once`.
        # W is stored bf16 (halved HBM traffic for the dominant parameter);
        # accumulation stays f32 inside the kernel.
        self.w = (jax.random.normal(kw, (hidden, emb_dim), jnp.float32)
                  / jnp.sqrt(hidden)).astype(jnp.bfloat16)
        self.b = jax.random.normal(kb, (1, emb_dim), jnp.float32) * 0.01

    def run_to_model_once(self, description_pair):
        # The abstract encoder: embeds every description of the pair in ONE
        # fused pallas_call (W/b DMA'd once, single launch).
        x1, x2 = description_pair
        return embed_pair(x1, x2, self.w, self.b)

    def forward(self, description_1, description_2):
        # PyTorch semantics: concat -> embed all -> split at the half point.
        # The embedding is row-independent, so embedding both halves inside one
        # fused kernel call is exactly equivalent while avoiding a concatenated
        # HBM copy and a second W fetch / kernel launch.
        desc_1_emb, desc_2_emb = self.run_to_model_once((description_1, description_2))
        return desc_1_emb, desc_2_emb


if __name__ == "__main__":
    # Small shapes: batch=2 descriptions per side, seq=8, hidden=32, emb_dim=32.
    B, S, H, D = 2, 8, 32, 32
    key = jax.random.PRNGKey(0)
    k1, k2, kp = jax.random.split(key, 3)

    # Pre-tokenized description features, carried as bf16 (halved HBM traffic).
    description_1 = jax.random.normal(k1, (B, S, H), jnp.float32).astype(jnp.bfloat16)
    description_2 = jax.random.normal(k2, (B, S, H), jnp.float32).astype(jnp.bfloat16)

    model = PairEmbeddingModel("pallas_pair_embedding", hidden=H, emb_dim=D, key=kp)

    d1_emb, d2_emb = model.forward(description_1, description_2)
    jax.block_until_ready((d1_emb, d2_emb))

    # Reference in plain JAX / f32 (matmul-then-mean form; equivalent by
    # linearity — tolerance covers bf16 rounding + reassociation).
    x1f = description_1.astype(jnp.float32)
    x2f = description_2.astype(jnp.float32)
    wf = model.w.astype(jnp.float32)
    all_desc = jnp.concatenate([x1f, x2f], axis=0)
    ref = jnp.mean(jnp.einsum("nsh,hd->nsd", all_desc, wf), axis=1) + model.b
    ref1, ref2 = ref[:B], ref[B:]

    assert d1_emb.shape == (B, D) and d2_emb.shape == (B, D)
    assert jnp.allclose(d1_emb, ref1, atol=1e-2, rtol=1e-2)
    assert jnp.allclose(d2_emb, ref2, atol=1e-2, rtol=1e-2)

    print("KERNEL_OK")
</pallas_src>

<mosaic_0001>
module attributes {stable_mosaic.version = 11 : i64} {
  func.func @_pair_embed_kernel(%arg0: i32, %arg1: i32, %arg2: memref<8x8x32xbf16, #tpu.memory_space<vmem>>, %arg3: memref<8x8x32xbf16, #tpu.memory_space<vmem>>, %arg4: memref<32x128xbf16, #tpu.memory_space<vmem>>, %arg5: memref<1x128xf32, #tpu.memory_space<vmem>>, %arg6: memref<8x128xf32, #tpu.memory_space<vmem>>, %arg7: memref<8x128xf32, #tpu.memory_space<vmem>>, %arg8: memref<8x32xbf16, #tpu.memory_space<vmem>>, %arg9: memref<8x32xbf16, #tpu.memory_space<vmem>>) attributes {dimension_semantics = [#tpu.dimension_semantics<parallel>, #tpu.dimension_semantics<arbitrary>], iteration_bounds = array<i64: 1, 1>, scalar_prefetch = 0 : i64, scratch_operands = 2 : i64, tpu.core_type = #tpu.core_type<tc>, window_params = [{transform_indices = @transform_0, window_bounds = array<i64: 8, 8, 32>}, {transform_indices = @transform_1, window_bounds = array<i64: 8, 8, 32>}, {pipeline_mode = #tpu.pipeline_mode<synchronous>, transform_indices = @transform_2, window_bounds = array<i64: 32, 128>}, {pipeline_mode = #tpu.pipeline_mode<synchronous>, transform_indices = @transform_3, window_bounds = array<i64: 1, 128>}, {transform_indices = @transform_4, window_bounds = array<i64: 8, 128>}, {transform_indices = @transform_5, window_bounds = array<i64: 8, 128>}]} {
    %c0_i32 = arith.constant 0 : i32
    %0 = arith.cmpi eq, %arg1, %c0_i32 : i32
    %1 = arith.extui %0 : i1 to i32
    %c0_i32_0 = arith.constant 0 : i32
    %2 = arith.cmpi ne, %1, %c0_i32_0 : i32
    scf.if %2 {
      %c0_13 = arith.constant 0 : index
      %c0_14 = arith.constant 0 : index
      %c0_15 = arith.constant 0 : index
      %15 = vector.load %arg2[%c0_13, %c0_14, %c0_15] : memref<8x8x32xbf16, #tpu.memory_space<vmem>>, vector<8x8x32xbf16>
      %16 = arith.extf %15 : vector<8x8x32xbf16> to vector<8x8x32xf32>
      %cst_16 = arith.constant dense<0.000000e+00> : vector<8x32xf32>
      %17 = vector.multi_reduction <add>, %16, %cst_16 [1] : vector<8x8x32xf32> to vector<8x32xf32>
      %cst_17 = arith.constant 8.000000e+00 : f32
      %18 = vector.broadcast %cst_17 : f32 to vector<8x32xf32>
      %19 = arith.divf %17, %18 : vector<8x32xf32>
      %20 = arith.truncf %19 : vector<8x32xf32> to vector<8x32xbf16>
      %c0_18 = arith.constant 0 : index
      %c0_19 = arith.constant 0 : index
      %21 = vector.load %arg8[%c0_18, %c0_19] : memref<8x32xbf16, #tpu.memory_space<vmem>>, vector<8x32xbf16>
      tpu.vector_store %arg8[%c0_18, %c0_19], %20 {strides = array<i32>} : memref<8x32xbf16, #tpu.memory_space<vmem>>, vector<8x32xbf16>,
      %c0_20 = arith.constant 0 : index
      %c0_21 = arith.constant 0 : index
      %c0_22 = arith.constant 0 : index
      %22 = vector.load %arg3[%c0_20, %c0_21, %c0_22] : memref<8x8x32xbf16, #tpu.memory_space<vmem>>, vector<8x8x32xbf16>
      %23 = arith.extf %22 : vector<8x8x32xbf16> to vector<8x8x32xf32>
      %cst_23 = arith.constant dense<0.000000e+00> : vector<8x32xf32>
      %24 = vector.multi_reduction <add>, %23, %cst_23 [1] : vector<8x8x32xf32> to vector<8x32xf32>
      %cst_24 = arith.constant 8.000000e+00 : f32
      %25 = vector.broadcast %cst_24 : f32 to vector<8x32xf32>
      %26 = arith.divf %24, %25 : vector<8x32xf32>
      %27 = arith.truncf %26 : vector<8x32xf32> to vector<8x32xbf16>
      %c0_25 = arith.constant 0 : index
      %c0_26 = arith.constant 0 : index
      %28 = vector.load %arg9[%c0_25, %c0_26] : memref<8x32xbf16, #tpu.memory_space<vmem>>, vector<8x32xbf16>
      tpu.vector_store %arg9[%c0_25, %c0_26], %27 {strides = array<i32>} : memref<8x32xbf16, #tpu.memory_space<vmem>>, vector<8x32xbf16>,
    } else {
    }
    %c0 = arith.constant 0 : index
    %c0_1 = arith.constant 0 : index
    %3 = vector.load %arg4[%c0, %c0_1] : memref<32x128xbf16, #tpu.memory_space<vmem>>, vector<32x128xbf16>
    %c0_2 = arith.constant 0 : index
    %c0_3 = arith.constant 0 : index
    %4 = vector.load %arg5[%c0_2, %c0_3] : memref<1x128xf32, #tpu.memory_space<vmem>>, vector<1x128xf32>
    %c0_4 = arith.constant 0 : index
    %c0_5 = arith.constant 0 : index
    %5 = vector.load %arg8[%c0_4, %c0_5] : memref<8x32xbf16, #tpu.memory_space<vmem>>, vector<8x32xbf16>
    %cst = arith.constant dense<0.000000e+00> : vector<8x128xf32>
    %6 = tpu.matmul %5, %3, %cst {dimension_numbers = #tpu.dot_dimension_numbers<[1], [0], [0], [1], [0, 0, 1, 1], [], []>} : vector<8x32xbf16>, vector<32x128xbf16>, vector<8x128xf32> -> vector<8x128xf32>
    %7 = vector.broadcast %4 : vector<1x128xf32> to vector<8x128xf32>
    %8 = arith.addf %6, %7 : vector<8x128xf32>
    %c0_6 = arith.constant 0 : index
    %c0_7 = arith.constant 0 : index
    %9 = vector.load %arg6[%c0_6, %c0_7] : memref<8x128xf32, #tpu.memory_space<vmem>>, vector<8x128xf32>
    tpu.vector_store %arg6[%c0_6, %c0_7], %8 {strides = array<i32>} : memref<8x128xf32, #tpu.memory_space<vmem>>, vector<8x128xf32>,
    %c0_8 = arith.constant 0 : index
    %c0_9 = arith.constant 0 : index
    %10 = vector.load %arg9[%c0_8, %c0_9] : memref<8x32xbf16, #tpu.memory_space<vmem>>, vector<8x32xbf16>
    %cst_10 = arith.constant dense<0.000000e+00> : vector<8x128xf32>
    %11 = tpu.matmul %10, %3, %cst_10 {dimension_numbers = #tpu.dot_dimension_numbers<[1], [0], [0], [1], [0, 0, 1, 1], [], []>} : vector<8x32xbf16>, vector<32x128xbf16>, vector<8x128xf32> -> vector<8x128xf32>
    %12 = vector.broadcast %4 : vector<1x128xf32> to vector<8x128xf32>
    %13 = arith.addf %11, %12 : vector<8x128xf32>
    %c0_11 = arith.constant 0 : index
    %c0_12 = arith.constant 0 : index
    %14 = vector.load %arg7[%c0_11, %c0_12] : memref<8x128xf32, #tpu.memory_space<vmem>>, vector<8x128xf32>
    tpu.vector_store %arg7[%c0_11, %c0_12], %13 {strides = array<i32>} : memref<8x128xf32, #tpu.memory_space<vmem>>, vector<8x128xf32>,
    return
  }
  func.func @transform_0(%arg0: i32, %arg1: i32) -> (i32, i32, i32) {
    %c0_i32 = arith.constant 0 : i32
    %c0_i32_0 = arith.constant 0 : i32
    %c0_i32_1 = arith.constant 0 : i32
    return %arg0, %c0_i32, %c0_i32_0 : i32, i32, i32
  }
  func.func @transform_1(%arg0: i32, %arg1: i32) -> (i32, i32, i32) {
    %c0_i32 = arith.constant 0 : i32
    %c0_i32_0 = arith.constant 0 : i32
    %c0_i32_1 = arith.constant 0 : i32
    return %arg0, %c0_i32, %c0_i32_0 : i32, i32, i32
  }
  func.func @transform_2(%arg0: i32, %arg1: i32) -> (i32, i32) {
    %c0_i32 = arith.constant 0 : i32
    %c0_i32_0 = arith.constant 0 : i32
    return %c0_i32, %arg1 : i32, i32
  }
  func.func @transform_3(%arg0: i32, %arg1: i32) -> (i32, i32) {
    %c0_i32 = arith.constant 0 : i32
    %c0_i32_0 = arith.constant 0 : i32
    return %c0_i32, %arg1 : i32, i32
  }
  func.func @transform_4(%arg0: i32, %arg1: i32) -> (i32, i32) {
    %c0_i32 = arith.constant 0 : i32
    return %arg0, %arg1 : i32, i32
  }
  func.func @transform_5(%arg0: i32, %arg1: i32) -> (i32, i32) {
    %c0_i32 = arith.constant 0 : i32
    return %arg0, %arg1 : i32, i32
  }
}

</mosaic_0001>

<llo_original>
// kernel: tpu_custom_call.1
$region0: #{tpu_custom_call.1}
  #allocation0 [shape = 'u32[]', space=smem, size = 0x4, offset = 0x4, fixed_abs, tag = 'smem constant byte address 0x4 - core index']
  #allocation1 [shape = 'u32[72,128]{1,0:T(1,128)}', space=vmem, size = 0x9000, scoped, tag = 'internal scratch']
  #allocation2 [shape = 'bf16[8,32]{1,0:T(8,128)(2,1)}', space=vmem, size = 0x800, scoped, tag = 'scratch operand']
  #allocation3 [shape = 'bf16[8,32]{1,0:T(8,128)(2,1)}', space=vmem, size = 0x800, scoped, tag = 'scratch operand']
  %s0 = inlined_call_operand.hbm [shape: bf16[2,8,32], index: 0, kind: input, shape index: {}]
  %s1 = inlined_call_operand.hbm [shape: bf16[2,8,32], index: 1, kind: input, shape index: {}]
  %s2 = inlined_call_operand.hbm [shape: bf16[32,128], index: 2, kind: input, shape index: {}]
  %s3 = inlined_call_operand.vmem [shape: f32[1,128], index: 3, kind: input, shape index: {}]
  %s4 = inlined_call_operand.hbm [shape: f32[2,128], index: 4, kind: output, shape index: {0}]
  %s5 = inlined_call_operand.hbm [shape: f32[2,128], index: 5, kind: output, shape index: {1}]
  %6 = xla_tuple %s4, %s5
  %s7 = sld [smem:[#allocation0]]
  $region50: #{tpu_custom_call.1} parent=0
    _
  %s9 = ssub.s32 1, %s7
  %s10 = scalar_select 0, %s9, %s7
  $region1: #{tpu_custom_call.1} parent=0
    #allocation4 [shape = 'u8[16384]{0}', space=vmem, size = 0x4000, scoped, tag = 'input window, operand 0, single buffered']
    #allocation5 [shape = 's32[1]{0}', space=sflag, size = 0x4, scoped, tag = 'scoped memory for tpu_custom_call.1']
    #allocation6 [shape = 's32[1]{0}', space=sflag, size = 0x4, scoped, tag = 'scoped memory for tpu_custom_call.1']
    #allocation7 [shape = 'u8[16384]{0}', space=vmem, size = 0x4000, scoped, tag = 'input window, operand 1, single buffered']
    #allocation8 [shape = 's32[1]{0}', space=sflag, size = 0x4, scoped, tag = 'scoped memory for tpu_custom_call.1']
    #allocation9 [shape = 'u8[8192]{0}', space=vmem, size = 0x2000, scoped, tag = 'input window, operand 2, single buffered']
    #allocation10 [shape = 'u8[4096]{0}', space=vmem, size = 0x1000, scoped, tag = 'output window, operand 0, single buffered']
    #allocation11 [shape = 'u8[4096]{0}', space=vmem, size = 0x1000, scoped, tag = 'output window, operand 1, single buffered']
    #allocation12 [shape = 's32[1]{0}', space=sflag, size = 0x4, scoped, tag = 'scoped memory for tpu_custom_call.1']
    %11 = vsyncpa [#allocation5], 0
    %12 = vsyncpa [#allocation8], 0
    %13 = vsyncpa [#allocation6], 0
    %14 = vsyncpa [#allocation12], 0
    // Predicated region
    $region2: #{tpu_custom_call.1} parent=1 // pred_check
      _
    $region3: #{tpu_custom_call.1} parent=1 // pred_check_branch
      %16 = sbr.rel (0) target = $region5
    $region4: #{tpu_custom_call.1} parent=1 // pred_region
      %18 = vsyncadd [#allocation5], 384
      %s19 = sshll.u32 %s0, 4
      %s20 = int_to_ptr.hbm [resolvable:$true] %s19
      %s21 = sshll.u32 [#allocation4], 4
      %s22 = int_to_ptr.vmem [resolvable:$true] %s21
      %27 = dma.hbm_to_vmem [thread:$0]  %s20, 128, %s22, [#allocation5], 64, 64, 4
    $region5: #{tpu_custom_call.1} parent=1 // pred_fallthru
      _
    // Predicated region
    $region6: #{tpu_custom_call.1} parent=1 // pred_check
      _
    $region7: #{tpu_custom_call.1} parent=1 // pred_check_branch
      %29 = sbr.rel (0) target = $region9
    $region8: #{tpu_custom_call.1} parent=1 // pred_region
      %31 = vsyncadd [#allocation8], 384
      %s32 = sshll.u32 %s1, 4
      %s33 = int_to_ptr.hbm [resolvable:$true] %s32
      %s34 = sshll.u32 [#allocation7], 4
      %s35 = int_to_ptr.vmem [resolvable:$true] %s34
      %40 = dma.hbm_to_vmem [thread:$0]  %s33, 128, %s35, [#allocation8], 64, 64, 4
    $region9: #{tpu_custom_call.1} parent=1 // pred_fallthru
      _
    // Predicated region
    $region10: #{tpu_custom_call.1} parent=1 // pred_check
      _
    $region11: #{tpu_custom_call.1} parent=1 // pred_check_branch
      %42 = sbr.rel (0) target = $region13
    $region12: #{tpu_custom_call.1} parent=1 // pred_region
      %44 = vsyncadd [#allocation8], 0
      %s45 = sshll.u32 %s2, 4
      %s46 = int_to_ptr.hbm [resolvable:$true] %s45
      %s47 = sshll.u32 [#allocation9], 4
      %s48 = int_to_ptr.vmem [resolvable:$true] %s47
      %53 = dma.hbm_to_vmem [thread:$0]  %s46, 256, %s48, [#allocation8], 64, 64, 4
    $region13: #{tpu_custom_call.1} parent=1 // pred_fallthru
      _
    // Predicated region
    $region14: #{tpu_custom_call.1} parent=1 // pred_check
      _
    $region15: #{tpu_custom_call.1} parent=1 // pred_check_branch
      %55 = sbr.rel (0) target = $region17
    $region16: #{tpu_custom_call.1} parent=1 // pred_region
      _
    $region17: #{tpu_custom_call.1} parent=1 // pred_fallthru
      _
    // Predicated region
    $region18: #{tpu_custom_call.1} parent=1 // pred_check
      _
    $region19: #{tpu_custom_call.1} parent=1 // pred_check_branch
      %57 = sbr.rel (0) target = $region21
    $region20: #{tpu_custom_call.1} parent=1 // pred_region
      %59 = dma.done [#allocation5], 512
    $region21: #{tpu_custom_call.1} parent=1 // pred_fallthru
      _
    // Predicated region
    $region22: #{tpu_custom_call.1} parent=1 // pred_check
      _
    $region23: #{tpu_custom_call.1} parent=1 // pred_check_branch
      %61 = sbr.rel (0) target = $region25
    $region24: #{tpu_custom_call.1} parent=1 // pred_region
      %63 = dma.done [#allocation8], 512
    $region25: #{tpu_custom_call.1} parent=1 // pred_fallthru
      _
    // Predicated region
    $region26: #{tpu_custom_call.1} parent=1 // pred_check
      _
    $region27: #{tpu_custom_call.1} parent=1 // pred_check_branch
      %65 = sbr.rel (0) target = $region29
    $region28: #{tpu_custom_call.1} parent=1 // pred_region
      %67 = dma.done [#allocation8], 256
    $region29: #{tpu_custom_call.1} parent=1 // pred_fallthru
      _
    %p69 = scmp.eq.s32.totalorder 0, 0
    // Predicated region
    $region30: #{tpu_custom_call.1} parent=1 // pred_check
      %p70 = pneg %p69
    $region31: #{tpu_custom_call.1} parent=1 // pred_check_branch
      %72 = sbr.rel (%p70) target = $region33
    $region32: #{tpu_custom_call.1} parent=1 // pred_region
      %v73 = vld [vmem:[#allocation4] sm:$0xf]
      %v74 = vld [vmem:[#allocation4 + $0x4] sm:$0xf]
      %v75 = vld [vmem:[#allocation4 + $0x8] sm:$0xf]
      %v76 = vld [vmem:[#allocation4 + $0xc] sm:$0xf]
      %v77 = vld [vmem:[#allocation4 + $0x10] sm:$0xf]
      %v78 = vld [vmem:[#allocation4 + $0x14] sm:$0xf]
      %v79 = vld [vmem:[#allocation4 + $0x18] sm:$0xf]
      %v80 = vld [vmem:[#allocation4 + $0x1c] sm:$0xf]
      %v81 = vunpack.c.l.bf16 %v73
      %v82 = vunpack.c.l.bf16 %v74
      %v83 = vunpack.c.l.bf16 %v75
      %v84 = vunpack.c.l.bf16 %v76
      %v85 = vunpack.c.l.bf16 %v77
      %v86 = vunpack.c.l.bf16 %v78
      %v87 = vunpack.c.l.bf16 %v79
      %v88 = vunpack.c.l.bf16 %v80
      %vm89 = vcmask 261120
      %v90 = vsel %vm89, %v81, 0.0
      %v91 = vrot.slane %v90, 4
      %v92 = vadd.f32 %v90, %v91
      %v93 = vrot.slane %v92, 2
      %v94 = vadd.f32 %v92, %v93
      %v95 = vrot.slane %v94, 1
      %v96 = vadd.f32 %v94, %v95
      %v97 = vsel %vm89, %v82, 0.0
      %v98 = vrot.slane %v97, 4
      %v99 = vadd.f32 %v97, %v98
      %v100 = vrot.slane %v99, 2
      %v101 = vadd.f32 %v99, %v100
      %v102 = vrot.slane %v101, 1
      %v103 = vadd.f32 %v101, %v102
      %v104 = vsel %vm89, %v83, 0.0
      %v105 = vrot.slane %v104, 4
      %v106 = vadd.f32 %v104, %v105
      %v107 = vrot.slane %v106, 2
      %v108 = vadd.f32 %v106, %v107
      %v109 = vrot.slane %v108, 1
      %v110 = vadd.f32 %v108, %v109
      %v111 = vsel %vm89, %v84, 0.0
      %v112 = vrot.slane %v111, 4
      %v113 = vadd.f32 %v111, %v112
      %v114 = vrot.slane %v113, 2
      %v115 = vadd.f32 %v113, %v114
      %v116 = vrot.slane %v115, 1
      %v117 = vadd.f32 %v115, %v116
      %v118 = vsel %vm89, %v85, 0.0
      %v119 = vrot.slane %v118, 4
      %v120 = vadd.f32 %v118, %v119
      %v121 = vrot.slane %v120, 2
      %v122 = vadd.f32 %v120, %v121
      %v123 = vrot.slane %v122, 1
      %v124 = vadd.f32 %v122, %v123
      %v125 = vsel %vm89, %v86, 0.0
      %v126 = vrot.slane %v125, 4
      %v127 = vadd.f32 %v125, %v126
      %v128 = vrot.slane %v127, 2
      %v129 = vadd.f32 %v127, %v128
      %v130 = vrot.slane %v129, 1
      %v131 = vadd.f32 %v129, %v130
      %v132 = vsel %vm89, %v87, 0.0
      %v133 = vrot.slane %v132, 4
      %v134 = vadd.f32 %v132, %v133
      %v135 = vrot.slane %v134, 2
      %v136 = vadd.f32 %v134, %v135
      %v137 = vrot.slane %v136, 1
      %v138 = vadd.f32 %v136, %v137
      %v139 = vsel %vm89, %v88, 0.0
      %v140 = vrot.slane %v139, 4
      %v141 = vadd.f32 %v139, %v140
      %v142 = vrot.slane %v141, 2
      %v143 = vadd.f32 %v141, %v142
      %v144 = vrot.slane %v143, 1
      %v145 = vadd.f32 %v143, %v144
      %v146 = vrcp.pop 8.0
      %v147 = vmul.f32 8.0, %v146
      %v148 = vsub.f32 1.0, %v147
      %v149 = vmul.f32 %v146, %v148
      %v150 = vadd.f32 %v146, %v149
      %vm151 = vweird.f32 %v146
      %v152 = vsel %vm151, %v146, %v150
      %v153 = vmul.f32 %v96, %v152
      %v154 = vmul.f32 %v103, %v152
      %v155 = vmul.f32 %v110, %v152
      %v156 = vmul.f32 %v117, %v152
      %v157 = vmul.f32 %v124, %v152
      %v158 = vmul.f32 %v131, %v152
      %v159 = vmul.f32 %v138, %v152
      %v160 = vmul.f32 %v145, %v152
      %v161 = vpack.c.bf16 %v153, %v153
      %v162 = vpack.c.bf16 %v154, %v154
      %v163 = vpack.c.bf16 %v155, %v155
      %v164 = vpack.c.bf16 %v156, %v156
      %v165 = vpack.c.bf16 %v157, %v157
      %v166 = vpack.c.bf16 %v158, %v158
      %v167 = vpack.c.bf16 %v159, %v159
      %v168 = vpack.c.bf16 %v160, %v160
      %v177 = vunpack.c.l.b16 %v161
      %v178 = vunpack.c.l.b16 %v162
      %v179 = vunpack.c.l.b16 %v163
      %v180 = vunpack.c.l.b16 %v164
      %v181 = vunpack.c.l.b16 %v165
      %v182 = vunpack.c.l.b16 %v166
      %v183 = vunpack.c.l.b16 %v167
      %v184 = vunpack.c.l.b16 %v168
      %vm185 = vcmask 1041409
      %v186 = vsel %vm185, %v178, %v177
      %vm187 = vcmask 1042434
      %v188 = vsel %vm187, %v179, %v186
      %vm189 = vcmask 1043459
      %v190 = vsel %vm189, %v180, %v188
      %vm191 = vcmask 1044484
      %v192 = vsel %vm191, %v181, %v190
      %vm193 = vcmask 1045509
      %v194 = vsel %vm193, %v182, %v192
      %vm195 = vcmask 1046534
      %v196 = vsel %vm195, %v183, %v194
      %vm197 = vcmask 1047559
      %v198 = vsel %vm197, %v184, %v196
      %v199 = vpack.c.b16 %v198, %v198
      %vm201 = vcmask 257024
      %202 = vst.msk [vmem:[#allocation2] sm:$0xf] %vm201, %v199
      %v203 = vld [vmem:[#allocation7] sm:$0xf]
      %v204 = vld [vmem:[#allocation7 + $0x4] sm:$0xf]
      %v205 = vld [vmem:[#allocation7 + $0x8] sm:$0xf]
      %v206 = vld [vmem:[#allocation7 + $0xc] sm:$0xf]
      %v207 = vld [vmem:[#allocation7 + $0x10] sm:$0xf]
      %v208 = vld [vmem:[#allocation7 + $0x14] sm:$0xf]
      %v209 = vld [vmem:[#allocation7 + $0x18] sm:$0xf]
      %v210 = vld [vmem:[#allocation7 + $0x1c] sm:$0xf]
      %v211 = vunpack.c.l.bf16 %v203
      %v212 = vunpack.c.l.bf16 %v204
      %v213 = vunpack.c.l.bf16 %v205
      %v214 = vunpack.c.l.bf16 %v206
      %v215 = vunpack.c.l.bf16 %v207
      %v216 = vunpack.c.l.bf16 %v208
      %v217 = vunpack.c.l.bf16 %v209
      %v218 = vunpack.c.l.bf16 %v210
      %v219 = vsel %vm89, %v211, 0.0
      %v220 = vrot.slane %v219, 4
      %v221 = vadd.f32 %v219, %v220
      %v222 = vrot.slane %v221, 2
      %v223 = vadd.f32 %v221, %v222
      %v224 = vrot.slane %v223, 1
      %v225 = vadd.f32 %v223, %v224
      %v226 = vsel %vm89, %v212, 0.0
      %v227 = vrot.slane %v226, 4
      %v228 = vadd.f32 %v226, %v227
      %v229 = vrot.slane %v228, 2
      %v230 = vadd.f32 %v228, %v229
      %v231 = vrot.slane %v230, 1
      %v232 = vadd.f32 %v230, %v231
      %v233 = vsel %vm89, %v213, 0.0
      %v234 = vrot.slane %v233, 4
      %v235 = vadd.f32 %v233, %v234
      %v236 = vrot.slane %v235, 2
      %v237 = vadd.f32 %v235, %v236
      %v238 = vrot.slane %v237, 1
      %v239 = vadd.f32 %v237, %v238
      %v240 = vsel %vm89, %v214, 0.0
      %v241 = vrot.slane %v240, 4
      %v242 = vadd.f32 %v240, %v241
      %v243 = vrot.slane %v242, 2
      %v244 = vadd.f32 %v242, %v243
      %v245 = vrot.slane %v244, 1
      %v246 = vadd.f32 %v244, %v245
      %v247 = vsel %vm89, %v215, 0.0
      %v248 = vrot.slane %v247, 4
      %v249 = vadd.f32 %v247, %v248
      %v250 = vrot.slane %v249, 2
      %v251 = vadd.f32 %v249, %v250
      %v252 = vrot.slane %v251, 1
      %v253 = vadd.f32 %v251, %v252
      %v254 = vsel %vm89, %v216, 0.0
      %v255 = vrot.slane %v254, 4
      %v256 = vadd.f32 %v254, %v255
      %v257 = vrot.slane %v256, 2
      %v258 = vadd.f32 %v256, %v257
      %v259 = vrot.slane %v258, 1
      %v260 = vadd.f32 %v258, %v259
      %v261 = vsel %vm89, %v217, 0.0
      %v262 = vrot.slane %v261, 4
      %v263 = vadd.f32 %v261, %v262
      %v264 = vrot.slane %v263, 2
      %v265 = vadd.f32 %v263, %v264
      %v266 = vrot.slane %v265, 1
      %v267 = vadd.f32 %v265, %v266
      %v268 = vsel %vm89, %v218, 0.0
      %v269 = vrot.slane %v268, 4
      %v270 = vadd.f32 %v268, %v269
      %v271 = vrot.slane %v270, 2
      %v272 = vadd.f32 %v270, %v271
      %v273 = vrot.slane %v272, 1
      %v274 = vadd.f32 %v272, %v273
      %v275 = vmul.f32 %v225, %v152
      %v276 = vmul.f32 %v232, %v152
      %v277 = vmul.f32 %v239, %v152
      %v278 = vmul.f32 %v246, %v152
      %v279 = vmul.f32 %v253, %v152
      %v280 = vmul.f32 %v260, %v152
      %v281 = vmul.f32 %v267, %v152
      %v282 = vmul.f32 %v274, %v152
      %v283 = vpack.c.bf16 %v275, %v275
      %v284 = vpack.c.bf16 %v276, %v276
      %v285 = vpack.c.bf16 %v277, %v277
      %v286 = vpack.c.bf16 %v278, %v278
      %v287 = vpack.c.bf16 %v279, %v279
      %v288 = vpack.c.bf16 %v280, %v280
      %v289 = vpack.c.bf16 %v281, %v281
      %v290 = vpack.c.bf16 %v282, %v282
      %v299 = vunpack.c.l.b16 %v283
      %v300 = vunpack.c.l.b16 %v284
      %v301 = vunpack.c.l.b16 %v285
      %v302 = vunpack.c.l.b16 %v286
      %v303 = vunpack.c.l.b16 %v287
      %v304 = vunpack.c.l.b16 %v288
      %v305 = vunpack.c.l.b16 %v289
      %v306 = vunpack.c.l.b16 %v290
      %v307 = vsel %vm185, %v300, %v299
      %v308 = vsel %vm187, %v301, %v307
      %v309 = vsel %vm189, %v302, %v308
      %v310 = vsel %vm191, %v303, %v309
      %v311 = vsel %vm193, %v304, %v310
      %v312 = vsel %vm195, %v305, %v311
      %v313 = vsel %vm197, %v306, %v312
      %v314 = vpack.c.b16 %v313, %v313
      %316 = vst.msk [vmem:[#allocation3] sm:$0xf] %vm201, %v314
    $region33: #{tpu_custom_call.1} parent=1 // pred_fallthru
      _
    %v317 = vld [vmem:[#allocation9] sm:$0xf]
    %v318 = vld [vmem:[#allocation9 + $0x4] sm:$0xf]
    %v319 = vld [vmem:[#allocation9 + $0x8] sm:$0xf]
    %v320 = vld [vmem:[#allocation9 + $0xc] sm:$0xf]
    %v321 = vld [vmem:[%s3] sm:$0x1]
    %v322 = vld [vmem:[#allocation2] sm:$0xf]
    %v324 = vperm.slane %v321, 0
    %v330 = vunpack.c.l.b16 %v317
    %v331 = vunpack.c.l.b16 %v318
    %v332 = vunpack.c.l.b16 %v319
    %v333 = vunpack.c.l.b16 %v320
    %v334 = vpack.c.b16 %v331, %v330
    %v335 = vpack.c.b16 %v333, %v332
    %vm338 = vcmask 261120
    %v340 = vsel %vm338, %v322, 0
    %342 = vmatpush.bf16.msra.mxu0 0
    %343 = vmatpush.bf16.msra.mxu0 0
    %344 = vmatpush.bf16.msra.mxu0 0
    %345 = vmatpush.bf16.msra.mxu0 0
    %346 = vmatpush.bf16.msra.mxu0 0
    %347 = vmatpush.bf16.msra.mxu0 0
    %348 = vmatpush.bf16.msra.mxu0 %v335
    %349 = vmatpush.bf16.msra.mxu0 %v334
    %350 = vmatmul.bf16.gmra.mxu0 %v340
    %v351 = vpop.f32.mrf.mxu0
    %v352 = vadd.f32 %v324, %v351
    %v353 = vpop.f32.mrf.mxu0
    %354 = vdwg.mxu0
    %355 = vst [vmem:[#allocation10] sm:$0xff] %v352
    %v356 = vld [vmem:[#allocation3] sm:$0xf]
    %v358 = vsel %vm338, %v356, 0
    %360 = vmatpush.bf16.msra.mxu0 0
    %361 = vmatpush.bf16.msra.mxu0 0
    %362 = vmatpush.bf16.msra.mxu0 0
    %363 = vmatpush.bf16.msra.mxu0 0
    %364 = vmatpush.bf16.msra.mxu0 0
    %365 = vmatpush.bf16.msra.mxu0 0
    %366 = vmatpush.bf16.msra.mxu0 %v335
    %367 = vmatpush.bf16.msra.mxu0 %v334
    %368 = vmatmul.bf16.gmra.mxu0 %v358
    %v369 = vpop.f32.mrf.mxu0
    %v370 = vadd.f32 %v324, %v369
    %v371 = vpop.f32.mrf.mxu0
    %372 = vdwg.mxu0
    %373 = vst [vmem:[#allocation11] sm:$0xff] %v370
    // Predicated region
    $region34: #{tpu_custom_call.1} parent=1 // pred_check
      _
    $region35: #{tpu_custom_call.1} parent=1 // pred_check_branch
      %375 = sbr.rel (0) target = $region37
    $region36: #{tpu_custom_call.1} parent=1 // pred_region
      %377 = vsyncadd [#allocation6], 96
      %s378 = sshll.u32 [#allocation10], 4
      %s379 = int_to_ptr.vmem [resolvable:$true] %s378
      %s380 = sshll.u32 %s4, 4
      %s381 = int_to_ptr.hbm [resolvable:$true] %s380
      %386 = dma.vmem_to_hbm [thread:$0]  %s379, 32, %s381, [#allocation6], 32, 32, 2
    $region37: #{tpu_custom_call.1} parent=1 // pred_fallthru
      _
    // Predicated region
    $region38: #{tpu_custom_call.1} parent=1 // pred_check
      _
    $region39: #{tpu_custom_call.1} parent=1 // pred_check_branch
      %388 = sbr.rel (0) target = $region41
    $region40: #{tpu_custom_call.1} parent=1 // pred_region
      %390 = vsyncadd [#allocation12], 96
      %s391 = sshll.u32 [#allocation11], 4
      %s392 = int_to_ptr.vmem [resolvable:$true] %s391
      %s393 = sshll.u32 %s5, 4
      %s394 = int_to_ptr.hbm [resolvable:$true] %s393
      %399 = dma.vmem_to_hbm [thread:$0]  %s392, 32, %s394, [#allocation12], 32, 32, 2
    $region41: #{tpu_custom_call.1} parent=1 // pred_fallthru
      _
    // Predicated region
    $region42: #{tpu_custom_call.1} parent=1 // pred_check
      _
    $region43: #{tpu_custom_call.1} parent=1 // pred_check_branch
      %401 = sbr.rel (0) target = $region45
    $region44: #{tpu_custom_call.1} parent=1 // pred_region
      %403 = dma.done [#allocation6], 128
    $region45: #{tpu_custom_call.1} parent=1 // pred_fallthru
      _
    // Predicated region
    $region46: #{tpu_custom_call.1} parent=1 // pred_check
      _
    $region47: #{tpu_custom_call.1} parent=1 // pred_check_branch
      %405 = sbr.rel (0) target = $region49
    $region48: #{tpu_custom_call.1} parent=1 // pred_region
      %407 = dma.done [#allocation12], 128
    $region49: #{tpu_custom_call.1} parent=1 // pred_fallthru
      _
    %408 = vsyncpa [#allocation5], 1
    %409 = vsyncpa [#allocation8], 1
    %410 = vsyncpa [#allocation6], 1
    %411 = vsyncpa [#allocation12], 1

</llo_original>
